<compile_context>
chip_gen: v6e
topology: v6e:2x2x1
jax: 0.10.0
libtpu: 0.0.40
codegen_flags: <defaults>
</compile_context>

<pallas_src>
import functools

import jax
import jax.numpy as jnp
from jax.experimental import pallas as pl
from jax.experimental.pallas import tpu as pltpu


def _round_up(x, m):
    return (x + m - 1) // m * m


def _mean_loss_kernel(a_ref, p_ref, n_ref, out_ref, *, an, ap, n_rows, tile_n):
    pid = pl.program_id(0)

    # Native-dtype blocks in VMEM; upcast in-register (compute stays f32).
    a = a_ref[...].astype(jnp.float32)
    p = p_ref[...].astype(jnp.float32)
    n = n_ref[...].astype(jnp.float32)

    # Row reductions on raw inputs (keepdims -> stay 2-D / (TILE_N, 1)).
    a_sq = jnp.sum(a * a, axis=1, keepdims=True)
    p_sq = jnp.sum(p * p, axis=1, keepdims=True)
    n_sq = jnp.sum(n * n, axis=1, keepdims=True)
    an_dot = jnp.sum(a * n, axis=1, keepdims=True)
    ap_dot = jnp.sum(a * p, axis=1, keepdims=True)

    # rsqrt on EUP; eps only guards the degenerate all-zero row.
    eps = 1e-30
    a_r = jax.lax.rsqrt(jnp.maximum(a_sq, eps))
    p_r = jax.lax.rsqrt(jnp.maximum(p_sq, eps))
    n_r = jax.lax.rsqrt(jnp.maximum(n_sq, eps))

    an_sim = an_dot * a_r * n_r  # cosine(anchor, neg), (TILE_N, 1)
    ap_sim = ap_dot * a_r * p_r  # cosine(anchor, pos), (TILE_N, 1)

    an_los = jnp.maximum(an_sim - an, 0.0)
    ap_los = jnp.maximum(ap - ap_sim, 0.0)

    # Mask rows past N (last partial tile) and fuse both hinges into ONE reduce.
    row = jax.lax.broadcasted_iota(jnp.int32, (tile_n, 1), 0) + pid * tile_n
    loss = jnp.where(row < n_rows, an_los + ap_los, 0.0)

    # Per-block partial sum -> scalar SMEM slot (no lane-masked VMEM store,
    # no serial accumulator: blocks are independent, axis is "parallel").
    out_ref[0, 0] = jnp.sum(loss)


@functools.partial(jax.jit, static_argnames=("an", "ap"))
def mean_loss(anchor, pos, neg, *, an, ap):
    """Pallas implementation of MeanLoss(an, ap).forward(anchor, pos, neg)."""
    n_rows, d = anchor.shape

    # Tile over rows; multiple of 8 sublanes, capped so double-buffered blocks
    # stay tiny relative to every generation's VMEM (incl. v7x's 64 MiB).
    tile_n = max(8, min(512, _round_up(n_rows, 8)))
    num_blocks = pl.cdiv(n_rows, tile_n)

    kernel = functools.partial(
        _mean_loss_kernel, an=float(an), ap=float(ap),
        n_rows=n_rows, tile_n=tile_n)

    in_spec = pl.BlockSpec((tile_n, d), lambda i: (i, 0))
    partials = pl.pallas_call(
        kernel,
        out_shape=jax.ShapeDtypeStruct((num_blocks, 1), jnp.float32),
        grid=(num_blocks,),
        in_specs=[in_spec, in_spec, in_spec],
        out_specs=pl.BlockSpec((1, 1), lambda i: (i, 0),
                               memory_space=pltpu.MemorySpace.SMEM),
        compiler_params=pltpu.CompilerParams(
            dimension_semantics=("parallel",)),
    )(anchor, pos, neg)

    # mean(an_los) + mean(ap_los) == sum over all rows / N ; this tiny sum and
    # the constant multiply fuse into the surrounding jit.
    return jnp.sum(partials) * (1.0 / float(n_rows))


def _reference(anchor, pos, neg, *, an, ap):
    def l2norm(v):
        return v / jnp.linalg.norm(v, axis=1, keepdims=True)

    a, p, n = l2norm(anchor), l2norm(pos), l2norm(neg)
    an_gap = jnp.sum(a * n, axis=1) - an
    ap_gap = ap - jnp.sum(a * p, axis=1)
    an_los = jnp.where(an_gap >= 0.0, an_gap, 0.0)
    ap_los = jnp.where(ap_gap >= 0.0, ap_gap, 0.0)
    return jnp.mean(an_los) + jnp.mean(ap_los)


if __name__ == "__main__":
    # MeanLoss.__init__ margins (deterministic, in-script).
    AN_MARGIN = 0.3
    AP_MARGIN = 0.7

    N, D = 8, 32  # batch of 8 embeddings, hidden dim 32
    key = jax.random.PRNGKey(0)
    k1, k2, k3 = jax.random.split(key, 3)
    anchor = jax.random.normal(k1, (N, D), dtype=jnp.float32)
    pos = jax.random.normal(k2, (N, D), dtype=jnp.float32)
    neg = jax.random.normal(k3, (N, D), dtype=jnp.float32)

    loss = mean_loss(anchor, pos, neg, an=AN_MARGIN, ap=AP_MARGIN)
    loss = jax.block_until_ready(loss)

    ref = _reference(anchor, pos, neg, an=AN_MARGIN, ap=AP_MARGIN)
    assert jnp.allclose(loss, ref, atol=1e-5, rtol=1e-5), (loss, ref)

    print("KERNEL_OK")
</pallas_src>

<mosaic_0001>
module attributes {stable_mosaic.version = 11 : i64} {
  func.func @_mean_loss_kernel(%arg0: i32, %arg1: memref<8x32xf32, #tpu.memory_space<vmem>>, %arg2: memref<8x32xf32, #tpu.memory_space<vmem>>, %arg3: memref<8x32xf32, #tpu.memory_space<vmem>>, %arg4: memref<1x1xf32, #tpu.memory_space<smem>>) attributes {dimension_semantics = [#tpu.dimension_semantics<parallel>], iteration_bounds = array<i64: 1>, scalar_prefetch = 0 : i64, scratch_operands = 0 : i64, tpu.core_type = #tpu.core_type<tc>, window_params = [{transform_indices = @transform_0, window_bounds = array<i64: 8, 32>}, {transform_indices = @transform_1, window_bounds = array<i64: 8, 32>}, {transform_indices = @transform_2, window_bounds = array<i64: 8, 32>}, {transform_indices = @transform_3, window_bounds = array<i64: 1, 1>}]} {
    %c0 = arith.constant 0 : index
    %c0_0 = arith.constant 0 : index
    %0 = vector.load %arg1[%c0, %c0_0] : memref<8x32xf32, #tpu.memory_space<vmem>>, vector<8x32xf32>
    %c0_1 = arith.constant 0 : index
    %c0_2 = arith.constant 0 : index
    %1 = vector.load %arg2[%c0_1, %c0_2] : memref<8x32xf32, #tpu.memory_space<vmem>>, vector<8x32xf32>
    %c0_3 = arith.constant 0 : index
    %c0_4 = arith.constant 0 : index
    %2 = vector.load %arg3[%c0_3, %c0_4] : memref<8x32xf32, #tpu.memory_space<vmem>>, vector<8x32xf32>
    %3 = arith.mulf %0, %0 : vector<8x32xf32>
    %cst = arith.constant dense<0.000000e+00> : vector<8xf32>
    %4 = vector.multi_reduction <add>, %3, %cst [1] : vector<8x32xf32> to vector<8xf32>
    %5 = vector.shape_cast %4 : vector<8xf32> to vector<8x1xf32>
    %6 = arith.mulf %1, %1 : vector<8x32xf32>
    %cst_5 = arith.constant dense<0.000000e+00> : vector<8xf32>
    %7 = vector.multi_reduction <add>, %6, %cst_5 [1] : vector<8x32xf32> to vector<8xf32>
    %8 = vector.shape_cast %7 : vector<8xf32> to vector<8x1xf32>
    %9 = arith.mulf %2, %2 : vector<8x32xf32>
    %cst_6 = arith.constant dense<0.000000e+00> : vector<8xf32>
    %10 = vector.multi_reduction <add>, %9, %cst_6 [1] : vector<8x32xf32> to vector<8xf32>
    %11 = vector.shape_cast %10 : vector<8xf32> to vector<8x1xf32>
    %12 = arith.mulf %0, %2 : vector<8x32xf32>
    %cst_7 = arith.constant dense<0.000000e+00> : vector<8xf32>
    %13 = vector.multi_reduction <add>, %12, %cst_7 [1] : vector<8x32xf32> to vector<8xf32>
    %14 = vector.shape_cast %13 : vector<8xf32> to vector<8x1xf32>
    %15 = arith.mulf %0, %1 : vector<8x32xf32>
    %cst_8 = arith.constant dense<0.000000e+00> : vector<8xf32>
    %16 = vector.multi_reduction <add>, %15, %cst_8 [1] : vector<8x32xf32> to vector<8xf32>
    %17 = vector.shape_cast %16 : vector<8xf32> to vector<8x1xf32>
    %cst_9 = arith.constant 1.000000e-30 : f32
    %18 = vector.broadcast %cst_9 : f32 to vector<8x1xf32>
    %19 = arith.maximumf %5, %18 : vector<8x1xf32>
    %20 = math.rsqrt %19 : vector<8x1xf32>
    %cst_10 = arith.constant 1.000000e-30 : f32
    %21 = vector.broadcast %cst_10 : f32 to vector<8x1xf32>
    %22 = arith.maximumf %8, %21 : vector<8x1xf32>
    %23 = math.rsqrt %22 : vector<8x1xf32>
    %cst_11 = arith.constant 1.000000e-30 : f32
    %24 = vector.broadcast %cst_11 : f32 to vector<8x1xf32>
    %25 = arith.maximumf %11, %24 : vector<8x1xf32>
    %26 = math.rsqrt %25 : vector<8x1xf32>
    %27 = arith.mulf %14, %20 : vector<8x1xf32>
    %28 = arith.mulf %27, %26 : vector<8x1xf32>
    %29 = arith.mulf %17, %20 : vector<8x1xf32>
    %30 = arith.mulf %29, %23 : vector<8x1xf32>
    %cst_12 = arith.constant 3.000000e-01 : f32
    %31 = vector.broadcast %cst_12 : f32 to vector<8x1xf32>
    %32 = arith.subf %28, %31 : vector<8x1xf32>
    %cst_13 = arith.constant 0.000000e+00 : f32
    %33 = vector.broadcast %cst_13 : f32 to vector<8x1xf32>
    %34 = arith.maximumf %32, %33 : vector<8x1xf32>
    %cst_14 = arith.constant 0.699999988 : f32
    %35 = vector.broadcast %cst_14 : f32 to vector<8x1xf32>
    %36 = arith.subf %35, %30 : vector<8x1xf32>
    %cst_15 = arith.constant 0.000000e+00 : f32
    %37 = vector.broadcast %cst_15 : f32 to vector<8x1xf32>
    %38 = arith.maximumf %36, %37 : vector<8x1xf32>
    %39 = tpu.iota {dimensions = array<i32: 0>} : vector<8x1xi32>
    %c8_i32 = arith.constant 8 : i32
    %40 = arith.muli %arg0, %c8_i32 : i32
    %41 = vector.broadcast %40 : i32 to vector<8x1xi32>
    %42 = arith.addi %39, %41 : vector<8x1xi32>
    %c8_i32_16 = arith.constant 8 : i32
    %43 = vector.broadcast %c8_i32_16 : i32 to vector<8x1xi32>
    %44 = arith.cmpi slt, %42, %43 : vector<8x1xi32>
    %45 = arith.addf %34, %38 : vector<8x1xf32>
    %cst_17 = arith.constant 0.000000e+00 : f32
    %46 = vector.broadcast %cst_17 : f32 to vector<8x1xf32>
    %47 = arith.select %44, %45, %46 : vector<8x1xi1>, vector<8x1xf32>
    %48 = vector.shape_cast %47 : vector<8x1xf32> to vector<1x8x1xf32>
    %cst_18 = arith.constant dense<0.000000e+00> : vector<1xf32>
    %49 = vector.multi_reduction <add>, %48, %cst_18 [1, 2] : vector<1x8x1xf32> to vector<1xf32>
    %50 = vector.shape_cast %49 : vector<1xf32> to vector<1x1x1xf32>
    %51 = vector.extract %50[0, 0, 0] : f32 from vector<1x1x1xf32>
    %c0_19 = arith.constant 0 : index
    %c0_20 = arith.constant 0 : index
    %52 = memref.load %arg4[%c0_19, %c0_20] : memref<1x1xf32, #tpu.memory_space<smem>>
    memref.store %51, %arg4[%c0_19, %c0_20] : memref<1x1xf32, #tpu.memory_space<smem>>
    return
  }
  func.func @transform_0(%arg0: i32) -> (i32, i32) {
    %c0_i32 = arith.constant 0 : i32
    %c0_i32_0 = arith.constant 0 : i32
    return %arg0, %c0_i32 : i32, i32
  }
  func.func @transform_1(%arg0: i32) -> (i32, i32) {
    %c0_i32 = arith.constant 0 : i32
    %c0_i32_0 = arith.constant 0 : i32
    return %arg0, %c0_i32 : i32, i32
  }
  func.func @transform_2(%arg0: i32) -> (i32, i32) {
    %c0_i32 = arith.constant 0 : i32
    %c0_i32_0 = arith.constant 0 : i32
    return %arg0, %c0_i32 : i32, i32
  }
  func.func @transform_3(%arg0: i32) -> (i32, i32) {
    %c0_i32 = arith.constant 0 : i32
    %c0_i32_0 = arith.constant 0 : i32
    return %arg0, %c0_i32 : i32, i32
  }
}

</mosaic_0001>

<llo_original>
// kernel: mean_loss.1
$region0: #{mean_loss.1}
  #allocation0 [shape = 'u32[]', space=smem, size = 0x4, offset = 0x4, fixed_abs, tag = 'smem constant byte address 0x4 - core index']
  #allocation1 [shape = 'u32[144,128]{1,0:T(1,128)}', space=vmem, size = 0x12000, scoped, tag = 'internal scratch']
  %s0 = inlined_call_operand.hbm [shape: f32[8,32], index: 0, kind: input, shape index: {}]
  %s1 = inlined_call_operand.hbm [shape: f32[8,32], index: 1, kind: input, shape index: {}]
  %s2 = inlined_call_operand.hbm [shape: f32[8,32], index: 2, kind: input, shape index: {}]
  %s3 = inlined_call_operand.hbm [shape: f32[1,1], index: 3, kind: output, shape index: {}]
  %s4 = sld [smem:[#allocation0]]
  $region34: #{mean_loss.1} parent=0
    _
  %s6 = ssub.s32 1, %s4
  %s7 = scalar_select 0, %s6, %s4
  $region1: #{mean_loss.1} parent=0
    #allocation2 [shape = 'u8[4096]{0}', space=vmem, size = 0x1000, scoped, tag = 'input window, operand 0, single buffered']
    #allocation3 [shape = 's32[1]{0}', space=sflag, size = 0x4, scoped, tag = 'scoped memory for mean_loss.1']
    #allocation4 [shape = 's32[1]{0}', space=sflag, size = 0x4, scoped, tag = 'scoped memory for mean_loss.1']
    #allocation5 [shape = 'u8[4096]{0}', space=vmem, size = 0x1000, scoped, tag = 'input window, operand 1, single buffered']
    #allocation6 [shape = 's32[1]{0}', space=sflag, size = 0x4, scoped, tag = 'scoped memory for mean_loss.1']
    #allocation7 [shape = 'u8[4096]{0}', space=vmem, size = 0x1000, scoped, tag = 'input window, operand 2, single buffered']
    #allocation8 [shape = 'u8[512]{0}', space=smem, size = 0x200, scoped, tag = 'output window, operand 0, single buffered']
    %8 = vsyncpa [#allocation3], 0
    %9 = vsyncpa [#allocation6], 0
    %10 = vsyncpa [#allocation4], 0
    // Predicated region
    $region2: #{mean_loss.1} parent=1 // pred_check
      _
    $region3: #{mean_loss.1} parent=1 // pred_check_branch
      %12 = sbr.rel (0) target = $region5
    $region4: #{mean_loss.1} parent=1 // pred_region
      %s14 = ssub.s32 128, 128
      %15 = vsyncadd [#allocation3], %s14
      %s17 = sshll.u32 [#allocation2], 4
      %s18 = int_to_ptr.vmem [resolvable:$true] %s17
      %20 = dma.hbm_to_vmem [thread:$0]  %s0, 128, %s18, [#allocation3]
    $region5: #{mean_loss.1} parent=1 // pred_fallthru
      _
    // Predicated region
    $region6: #{mean_loss.1} parent=1 // pred_check
      _
    $region7: #{mean_loss.1} parent=1 // pred_check_branch
      %22 = sbr.rel (0) target = $region9
    $region8: #{mean_loss.1} parent=1 // pred_region
      %s24 = ssub.s32 128, 128
      %25 = vsyncadd [#allocation6], %s24
      %s27 = sshll.u32 [#allocation5], 4
      %s28 = int_to_ptr.vmem [resolvable:$true] %s27
      %30 = dma.hbm_to_vmem [thread:$0]  %s1, 128, %s28, [#allocation6]
    $region9: #{mean_loss.1} parent=1 // pred_fallthru
      _
    // Predicated region
    $region10: #{mean_loss.1} parent=1 // pred_check
      _
    $region11: #{mean_loss.1} parent=1 // pred_check_branch
      %32 = sbr.rel (0) target = $region13
    $region12: #{mean_loss.1} parent=1 // pred_region
      %s34 = ssub.s32 128, 128
      %35 = vsyncadd [#allocation6], %s34
      %s37 = sshll.u32 [#allocation7], 4
      %s38 = int_to_ptr.vmem [resolvable:$true] %s37
      %40 = dma.hbm_to_vmem [thread:$0]  %s2, 128, %s38, [#allocation6]
    $region13: #{mean_loss.1} parent=1 // pred_fallthru
      _
    // Predicated region
    $region14: #{mean_loss.1} parent=1 // pred_check
      _
    $region15: #{mean_loss.1} parent=1 // pred_check_branch
      %42 = sbr.rel (0) target = $region17
    $region16: #{mean_loss.1} parent=1 // pred_region
      %43 = dma.done [#allocation3], 128
    $region17: #{mean_loss.1} parent=1 // pred_fallthru
      _
    // Predicated region
    $region18: #{mean_loss.1} parent=1 // pred_check
      _
    $region19: #{mean_loss.1} parent=1 // pred_check_branch
      %45 = sbr.rel (0) target = $region21
    $region20: #{mean_loss.1} parent=1 // pred_region
      %46 = dma.done [#allocation6], 128
    $region21: #{mean_loss.1} parent=1 // pred_fallthru
      _
    // Predicated region
    $region22: #{mean_loss.1} parent=1 // pred_check
      _
    $region23: #{mean_loss.1} parent=1 // pred_check_branch
      %48 = sbr.rel (0) target = $region25
    $region24: #{mean_loss.1} parent=1 // pred_region
      %49 = dma.done [#allocation6], 128
    $region25: #{mean_loss.1} parent=1 // pred_fallthru
      _
    %v50 = vld [vmem:[#allocation2] sm:$0xff]
    %v51 = vld [vmem:[#allocation5] sm:$0xff]
    %v52 = vld [vmem:[#allocation7] sm:$0xff]
    %v53 = vmul.f32 %v50, %v50
    %vm54 = vcmask 261120
    %v55 = vsel %vm54, %v53, 0.0
    %56 = vadd.xlane.f32.xlu0 %v55
    %v57 = vpop.xlane.xlu0 %56
    %v58 = vmul.f32 %v51, %v51
    %v59 = vsel %vm54, %v58, 0.0
    %60 = vadd.xlane.f32.xlu0 %v59
    %v61 = vpop.xlane.xlu0 %60
    %v62 = vmul.f32 %v52, %v52
    %v63 = vsel %vm54, %v62, 0.0
    %64 = vadd.xlane.f32.xlu0 %v63
    %v65 = vpop.xlane.xlu0 %64
    %v66 = vmul.f32 %v50, %v52
    %v67 = vsel %vm54, %v66, 0.0
    %68 = vadd.xlane.f32.xlu0 %v67
    %v69 = vpop.xlane.xlu0 %68
    %v70 = vmul.f32 %v50, %v51
    %v71 = vsel %vm54, %v70, 0.0
    %72 = vadd.xlane.f32.xlu0 %v71
    %v73 = vpop.xlane.xlu0 %72
    %v74 = vmax.f32 %v57, 1e-30
    %v75 = vrsqrt.pop %v74
    %v76 = vmax.f32 %v61, 1e-30
    %v77 = vrsqrt.pop %v76
    %v78 = vmax.f32 %v65, 1e-30
    %v79 = vrsqrt.pop %v78
    %v80 = vmul.f32 %v69, %v75
    %v81 = vmul.f32 %v80, %v79
    %v82 = vmul.f32 %v73, %v75
    %v83 = vmul.f32 %v82, %v77
    %v84 = vsub.f32 %v81, 0.3
    %v85 = vmax.f32 %v84, 0.0
    %v86 = vsub.f32 0.7, %v83
    %v87 = vmax.f32 %v86, 0.0
    %v88 = vlaneseq
    %v89 = vshrl.u32 %v88, 7
    %s90 = smul.u32 0, 8
    %v91 = vstv %s90
    %v92 = vadd.s32 %v89, %v91
    %vm93 = vcmp.lt.s32.totalorder %v92, 8
    %v94 = vadd.f32 %v85, %v87
    %v95 = vsel %vm93, %v94, 0.0
    %vm96 = vcmask 7168
    %v97 = vsel %vm96, %v95, 0.0
    %98 = vadd.xlane.f32.xlu0 %v97
    %v99 = vpop.xlane.xlu0 %98
    %v100 = vrot.slane %v99, 4
    %v101 = vadd.f32 %v99, %v100
    %v102 = vrot.slane %v101, 2
    %v103 = vadd.f32 %v101, %v102
    %v104 = vrot.slane %v103, 1
    %v105 = vadd.f32 %v103, %v104
    %s106 = vtos %v105
    %s107 = scalar_lea.smem [#allocation8], 0
    %108 = sst [smem:[%s107]] %s106
    // Predicated region
    $region26: #{mean_loss.1} parent=1 // pred_check
      _
    $region27: #{mean_loss.1} parent=1 // pred_check_branch
      %110 = sbr.rel (0) target = $region29
    $region28: #{mean_loss.1} parent=1 // pred_region
      %s112 = ssub.s32 16, 16
      %113 = vsyncadd [#allocation4], %s112
      %116 = dma.smem_to_hbm [#allocation8], 16, %s3, [#allocation4]
    $region29: #{mean_loss.1} parent=1 // pred_fallthru
      _
    // Predicated region
    $region30: #{mean_loss.1} parent=1 // pred_check
      _
    $region31: #{mean_loss.1} parent=1 // pred_check_branch
      %118 = sbr.rel (0) target = $region33
    $region32: #{mean_loss.1} parent=1 // pred_region
      %119 = dma.done [#allocation4], 16
    $region33: #{mean_loss.1} parent=1 // pred_fallthru
      _
    %120 = sfence
    %121 = vsyncpa [#allocation3], 1
    %122 = vsyncpa [#allocation6], 1
    %123 = vsyncpa [#allocation4], 1

</llo_original>
